<compile_context>
chip_gen: v7x
topology: tpu7x:2x2x1
jax: 0.10.0
libtpu: 0.0.40
codegen_flags: <defaults>
</compile_context>

<pallas_src>
import functools

import numpy as np
import jax
import jax.numpy as jnp
from jax.experimental import pallas as pl
from jax.experimental.pallas import tpu as pltpu

# ---- deterministic weights, exactly as in the PyTorch script ----------------
_filter_vals = np.array([[-1, -1, 1, 1],
                         [-1, -1, 1, 1],
                         [-1, -1, 1, 1],
                         [-1, -1, 1, 1]], dtype=np.float32)
_filter_1 = _filter_vals
_filter_2 = -_filter_1
_filter_3 = _filter_1.T
_filter_4 = -_filter_3
FILTERS = np.stack([_filter_1, _filter_2, _filter_3, _filter_4])  # (4, 4, 4)

KH, KW = 4, 4
C_OUT = 4


# ---- trace-time filter analysis (pure numpy, becomes compile-time plan) -----
def _factor_rank1(w2d, tol=1e-5):
    """Return (v, h) with outer(v, h) == w2d if w2d is rank-1, else None."""
    r = int(np.argmax(np.abs(w2d).sum(axis=1)))
    h = np.asarray(w2d[r], dtype=np.float64)
    c = int(np.argmax(np.abs(h)))
    if abs(h[c]) < tol:
        return None
    v = np.asarray(w2d[:, c], dtype=np.float64) / h[c]
    if np.allclose(np.outer(v, h), w2d, atol=tol, rtol=0.0):
        return v.astype(np.float32), h.astype(np.float32)
    return None


def _plan_filters(w):
    """Per-channel plan: ('dup',src) | ('neg',src) | ('sep',v,h) | ('dense',w2d)."""
    plan = []
    for co in range(w.shape[0]):
        entry = None
        for cp in range(co):
            if np.allclose(w[co], w[cp]):
                entry = ("dup", cp)
                break
            if np.allclose(w[co], -w[cp]):
                entry = ("neg", cp)
                break
        if entry is None:
            f = _factor_rank1(w[co])
            entry = ("sep", f[0], f[1]) if f is not None else ("dense", w[co])
        plan.append(entry)
    return plan


def _axpy(acc, wv, term):
    """acc += wv * term, with 0 / +1 / -1 weights folded into skip/add/sub."""
    if wv == 0.0:
        return acc
    if acc is None:
        return term if wv == 1.0 else (-term if wv == -1.0 else wv * term)
    if wv == 1.0:
        return acc + term
    if wv == -1.0:
        return acc - term
    return acc + wv * term


# ---- kernel ------------------------------------------------------------------
def _conv_relu_kernel(plan, x_ref, conv_ref, relu_ref):
    """plan: compile-time per-channel recipe.

    x_ref:    (H, W, NB)          VMEM  (images on the 128-lane axis)
    conv_ref: (C_OUT, Ho, Wo, NB) VMEM
    relu_ref: (C_OUT, Ho, Wo, NB) VMEM
    """
    c_out, Ho, Wo, nb = conv_ref.shape
    outs = [None] * c_out
    vcache = {}  # shared vertical partial sums, keyed by the vertical vector

    for co, entry in enumerate(plan):
        kind = entry[0]
        if kind == "dup":                       # identical filter seen earlier
            outs[co] = outs[entry[1]]
        elif kind == "neg":                     # exact negation of earlier channel
            src = outs[entry[1]]
            outs[co] = None if src is None else -src
        elif kind == "sep":                     # rank-1: vertical pass then horizontal
            v, h = entry[1], entry[2]
            vkey = tuple(np.round(v, 6).tolist())
            V = vcache.get(vkey)
            if V is None:
                for kh in range(len(v)):        # H-offset slices: leading dim, cheap
                    V = _axpy(V, float(v[kh]), x_ref[kh:kh + Ho, :, :])
                vcache[vkey] = V
            acc = None
            if V is not None:
                for kw in range(len(h)):        # 4 sublane-shifted slices per channel
                    acc = _axpy(acc, float(h[kw]), V[:, kw:kw + Wo, :])
            outs[co] = acc
        else:                                    # dense fallback: tap-outer accumulate
            w2d = entry[1]
            acc = None
            for kh in range(w2d.shape[0]):
                for kw in range(w2d.shape[1]):
                    acc = _axpy(acc, float(w2d[kh, kw]),
                                x_ref[kh:kh + Ho, kw:kw + Wo, :])
            outs[co] = acc

    for co in range(c_out):
        acc = outs[co]
        if acc is None:
            acc = jnp.zeros((Ho, Wo, nb), jnp.float32)
        conv_ref[co] = acc.astype(conv_ref.dtype)                 # lane-dense store
        relu_ref[co] = jnp.maximum(acc, 0.0).astype(relu_ref.dtype)


# ---- wrapper -----------------------------------------------------------------
def net_forward(x, weight, block_n=None):
    """x: (N, 1, H, W) f32; weight: (4, 1, 4, 4) f32 -> (conv_x, relu_x) NCHW."""
    N, Cin, H, W = x.shape
    assert Cin == 1
    Ho, Wo = H - KH + 1, W - KW + 1

    # Weights become trace-time Python constants; filter structure is analysed
    # once here (separability / negation duplicates) and baked into the kernel.
    w = np.asarray(jax.device_get(weight), dtype=np.float32).reshape(C_OUT, KH, KW)
    plan = _plan_filters(w)

    if block_n is None:
        # Multiple of 128 (lane-dense stores), up to 256 images per grid step:
        # far above the ~600-cycle step-overhead amortization point and well
        # inside the 32 MiB scoped-VMEM default even with double buffering.
        block_n = min(256, 128 * pl.cdiv(N, 128))
    n_blocks = pl.cdiv(N, block_n)
    n_pad = n_blocks * block_n

    # Layout plumbing: NCHW -> (H, W, N_pad) so images sit on the lane axis.
    xt = jnp.transpose(x[:, 0, :, :], (1, 2, 0))
    if n_pad != N:
        xt = jnp.pad(xt, ((0, 0), (0, 0), (0, n_pad - N)))

    out_sds = jax.ShapeDtypeStruct((C_OUT, Ho, Wo, n_pad), jnp.float32)
    conv_t, relu_t = pl.pallas_call(
        functools.partial(_conv_relu_kernel, plan),
        out_shape=(out_sds, out_sds),
        grid=(n_blocks,),
        in_specs=[pl.BlockSpec((H, W, block_n), lambda b: (0, 0, b))],
        out_specs=(
            pl.BlockSpec((C_OUT, Ho, Wo, block_n), lambda b: (0, 0, 0, b)),
            pl.BlockSpec((C_OUT, Ho, Wo, block_n), lambda b: (0, 0, 0, b)),
        ),
        compiler_params=pltpu.CompilerParams(
            dimension_semantics=("parallel",)),
    )(xt)

    # Back to NCHW, drop padding.
    conv_x = jnp.transpose(conv_t, (3, 0, 1, 2))[:N]
    relu_x = jnp.transpose(relu_t, (3, 0, 1, 2))[:N]
    return conv_x, relu_x


if __name__ == "__main__":
    key = jax.random.PRNGKey(0)
    N, H, W = 2, 16, 16
    x = jax.random.normal(key, (N, 1, H, W), dtype=jnp.float32)
    weight = jnp.asarray(FILTERS, dtype=jnp.float32)[:, None, :, :]  # (4,1,4,4)

    conv_x, relu_x = net_forward(x, weight)
    jax.block_until_ready((conv_x, relu_x))

    # Reference check (plain JAX conv, 'VALID' padding like the PyTorch module).
    ref = jax.lax.conv_general_dilated(
        x, weight, window_strides=(1, 1), padding="VALID",
        dimension_numbers=("NCHW", "OIHW", "NCHW"))
    assert jnp.allclose(conv_x, ref, atol=1e-4, rtol=1e-4)
    assert jnp.allclose(relu_x, jnp.maximum(ref, 0.0), atol=1e-4, rtol=1e-4)

    print("KERNEL_OK")
</pallas_src>

<mosaic_0001>
module attributes {stable_mosaic.version = 11 : i64} {
  func.func @_conv_relu_kernel(%arg0: i32, %arg1: memref<16x16x128xf32, #tpu.memory_space<vmem>>, %arg2: memref<4x13x13x128xf32, #tpu.memory_space<vmem>>, %arg3: memref<4x13x13x128xf32, #tpu.memory_space<vmem>>) attributes {dimension_semantics = [#tpu.dimension_semantics<parallel>], iteration_bounds = array<i64: 1>, scalar_prefetch = 0 : i64, scratch_operands = 0 : i64, tpu.core_type = #tpu.core_type<tc>, window_params = [{transform_indices = @transform_0, window_bounds = array<i64: 16, 16, 128>}, {transform_indices = @transform_1, window_bounds = array<i64: 4, 13, 13, 128>}, {transform_indices = @transform_2, window_bounds = array<i64: 4, 13, 13, 128>}]} {
    %c0 = arith.constant 0 : index
    %c0_0 = arith.constant 0 : index
    %c0_1 = arith.constant 0 : index
    %0 = vector.load %arg1[%c0, %c0_0, %c0_1] : memref<16x16x128xf32, #tpu.memory_space<vmem>>, vector<13x16x128xf32>
    %c1 = arith.constant 1 : index
    %c0_2 = arith.constant 0 : index
    %c0_3 = arith.constant 0 : index
    %1 = vector.load %arg1[%c1, %c0_2, %c0_3] : memref<16x16x128xf32, #tpu.memory_space<vmem>>, vector<13x16x128xf32>
    %2 = arith.addf %0, %1 : vector<13x16x128xf32>
    %c2 = arith.constant 2 : index
    %c0_4 = arith.constant 0 : index
    %c0_5 = arith.constant 0 : index
    %3 = vector.load %arg1[%c2, %c0_4, %c0_5] : memref<16x16x128xf32, #tpu.memory_space<vmem>>, vector<13x16x128xf32>
    %4 = arith.addf %2, %3 : vector<13x16x128xf32>
    %c3 = arith.constant 3 : index
    %c0_6 = arith.constant 0 : index
    %c0_7 = arith.constant 0 : index
    %5 = vector.load %arg1[%c3, %c0_6, %c0_7] : memref<16x16x128xf32, #tpu.memory_space<vmem>>, vector<13x16x128xf32>
    %6 = arith.addf %4, %5 : vector<13x16x128xf32>
    %7 = vector.extract_strided_slice %6 {offsets = [0, 0, 0], sizes = [13, 13, 128], strides = [1, 1, 1]} : vector<13x16x128xf32> to vector<13x13x128xf32>
    %cst = arith.constant 0.000000e+00 : f32
    %8 = vector.broadcast %cst : f32 to vector<13x13x128xf32>
    %9 = arith.subf %8, %7 : vector<13x13x128xf32>
    %10 = vector.extract_strided_slice %6 {offsets = [0, 1, 0], sizes = [13, 13, 128], strides = [1, 1, 1]} : vector<13x16x128xf32> to vector<13x13x128xf32>
    %11 = arith.subf %9, %10 : vector<13x13x128xf32>
    %12 = vector.extract_strided_slice %6 {offsets = [0, 2, 0], sizes = [13, 13, 128], strides = [1, 1, 1]} : vector<13x16x128xf32> to vector<13x13x128xf32>
    %13 = arith.addf %11, %12 : vector<13x13x128xf32>
    %14 = vector.extract_strided_slice %6 {offsets = [0, 3, 0], sizes = [13, 13, 128], strides = [1, 1, 1]} : vector<13x16x128xf32> to vector<13x13x128xf32>
    %15 = arith.addf %13, %14 : vector<13x13x128xf32>
    %cst_8 = arith.constant 0.000000e+00 : f32
    %16 = vector.broadcast %cst_8 : f32 to vector<13x13x128xf32>
    %17 = arith.subf %16, %15 : vector<13x13x128xf32>
    %c0_9 = arith.constant 0 : index
    %c0_10 = arith.constant 0 : index
    %c0_11 = arith.constant 0 : index
    %18 = vector.load %arg1[%c0_9, %c0_10, %c0_11] : memref<16x16x128xf32, #tpu.memory_space<vmem>>, vector<13x16x128xf32>
    %c1_12 = arith.constant 1 : index
    %c0_13 = arith.constant 0 : index
    %c0_14 = arith.constant 0 : index
    %19 = vector.load %arg1[%c1_12, %c0_13, %c0_14] : memref<16x16x128xf32, #tpu.memory_space<vmem>>, vector<13x16x128xf32>
    %20 = arith.addf %18, %19 : vector<13x16x128xf32>
    %c2_15 = arith.constant 2 : index
    %c0_16 = arith.constant 0 : index
    %c0_17 = arith.constant 0 : index
    %21 = vector.load %arg1[%c2_15, %c0_16, %c0_17] : memref<16x16x128xf32, #tpu.memory_space<vmem>>, vector<13x16x128xf32>
    %22 = arith.subf %20, %21 : vector<13x16x128xf32>
    %c3_18 = arith.constant 3 : index
    %c0_19 = arith.constant 0 : index
    %c0_20 = arith.constant 0 : index
    %23 = vector.load %arg1[%c3_18, %c0_19, %c0_20] : memref<16x16x128xf32, #tpu.memory_space<vmem>>, vector<13x16x128xf32>
    %24 = arith.subf %22, %23 : vector<13x16x128xf32>
    %25 = vector.extract_strided_slice %24 {offsets = [0, 0, 0], sizes = [13, 13, 128], strides = [1, 1, 1]} : vector<13x16x128xf32> to vector<13x13x128xf32>
    %cst_21 = arith.constant 0.000000e+00 : f32
    %26 = vector.broadcast %cst_21 : f32 to vector<13x13x128xf32>
    %27 = arith.subf %26, %25 : vector<13x13x128xf32>
    %28 = vector.extract_strided_slice %24 {offsets = [0, 1, 0], sizes = [13, 13, 128], strides = [1, 1, 1]} : vector<13x16x128xf32> to vector<13x13x128xf32>
    %29 = arith.subf %27, %28 : vector<13x13x128xf32>
    %30 = vector.extract_strided_slice %24 {offsets = [0, 2, 0], sizes = [13, 13, 128], strides = [1, 1, 1]} : vector<13x16x128xf32> to vector<13x13x128xf32>
    %31 = arith.subf %29, %30 : vector<13x13x128xf32>
    %32 = vector.extract_strided_slice %24 {offsets = [0, 3, 0], sizes = [13, 13, 128], strides = [1, 1, 1]} : vector<13x16x128xf32> to vector<13x13x128xf32>
    %33 = arith.subf %31, %32 : vector<13x13x128xf32>
    %cst_22 = arith.constant 0.000000e+00 : f32
    %34 = vector.broadcast %cst_22 : f32 to vector<13x13x128xf32>
    %35 = arith.subf %34, %33 : vector<13x13x128xf32>
    %c0_23 = arith.constant 0 : index
    %c0_24 = arith.constant 0 : index
    %c0_25 = arith.constant 0 : index
    %c0_26 = arith.constant 0 : index
    %36 = vector.load %arg2[%c0_23, %c0_24, %c0_25, %c0_26] : memref<4x13x13x128xf32, #tpu.memory_space<vmem>>, vector<1x13x13x128xf32>
    %37 = vector.shape_cast %36 : vector<1x13x13x128xf32> to vector<13x13x128xf32>
    %38 = vector.shape_cast %15 : vector<13x13x128xf32> to vector<1x13x13x128xf32>
    tpu.vector_store %arg2[%c0_23, %c0_24, %c0_25, %c0_26], %38 {strides = array<i32>} : memref<4x13x13x128xf32, #tpu.memory_space<vmem>>, vector<1x13x13x128xf32>,
    %cst_27 = arith.constant 0.000000e+00 : f32
    %39 = vector.broadcast %cst_27 : f32 to vector<13x13x128xf32>
    %40 = arith.maximumf %15, %39 : vector<13x13x128xf32>
    %c0_28 = arith.constant 0 : index
    %c0_29 = arith.constant 0 : index
    %c0_30 = arith.constant 0 : index
    %c0_31 = arith.constant 0 : index
    %41 = vector.load %arg3[%c0_28, %c0_29, %c0_30, %c0_31] : memref<4x13x13x128xf32, #tpu.memory_space<vmem>>, vector<1x13x13x128xf32>
    %42 = vector.shape_cast %41 : vector<1x13x13x128xf32> to vector<13x13x128xf32>
    %43 = vector.shape_cast %40 : vector<13x13x128xf32> to vector<1x13x13x128xf32>
    tpu.vector_store %arg3[%c0_28, %c0_29, %c0_30, %c0_31], %43 {strides = array<i32>} : memref<4x13x13x128xf32, #tpu.memory_space<vmem>>, vector<1x13x13x128xf32>,
    %c1_32 = arith.constant 1 : index
    %c0_33 = arith.constant 0 : index
    %c0_34 = arith.constant 0 : index
    %c0_35 = arith.constant 0 : index
    %44 = vector.load %arg2[%c1_32, %c0_33, %c0_34, %c0_35] : memref<4x13x13x128xf32, #tpu.memory_space<vmem>>, vector<1x13x13x128xf32>
    %45 = vector.shape_cast %44 : vector<1x13x13x128xf32> to vector<13x13x128xf32>
    %46 = vector.shape_cast %17 : vector<13x13x128xf32> to vector<1x13x13x128xf32>
    tpu.vector_store %arg2[%c1_32, %c0_33, %c0_34, %c0_35], %46 {strides = array<i32>} : memref<4x13x13x128xf32, #tpu.memory_space<vmem>>, vector<1x13x13x128xf32>,
    %cst_36 = arith.constant 0.000000e+00 : f32
    %47 = vector.broadcast %cst_36 : f32 to vector<13x13x128xf32>
    %48 = arith.maximumf %17, %47 : vector<13x13x128xf32>
    %c1_37 = arith.constant 1 : index
    %c0_38 = arith.constant 0 : index
    %c0_39 = arith.constant 0 : index
    %c0_40 = arith.constant 0 : index
    %49 = vector.load %arg3[%c1_37, %c0_38, %c0_39, %c0_40] : memref<4x13x13x128xf32, #tpu.memory_space<vmem>>, vector<1x13x13x128xf32>
    %50 = vector.shape_cast %49 : vector<1x13x13x128xf32> to vector<13x13x128xf32>
    %51 = vector.shape_cast %48 : vector<13x13x128xf32> to vector<1x13x13x128xf32>
    tpu.vector_store %arg3[%c1_37, %c0_38, %c0_39, %c0_40], %51 {strides = array<i32>} : memref<4x13x13x128xf32, #tpu.memory_space<vmem>>, vector<1x13x13x128xf32>,
    %c2_41 = arith.constant 2 : index
    %c0_42 = arith.constant 0 : index
    %c0_43 = arith.constant 0 : index
    %c0_44 = arith.constant 0 : index
    %52 = vector.load %arg2[%c2_41, %c0_42, %c0_43, %c0_44] : memref<4x13x13x128xf32, #tpu.memory_space<vmem>>, vector<1x13x13x128xf32>
    %53 = vector.shape_cast %52 : vector<1x13x13x128xf32> to vector<13x13x128xf32>
    %54 = vector.shape_cast %33 : vector<13x13x128xf32> to vector<1x13x13x128xf32>
    tpu.vector_store %arg2[%c2_41, %c0_42, %c0_43, %c0_44], %54 {strides = array<i32>} : memref<4x13x13x128xf32, #tpu.memory_space<vmem>>, vector<1x13x13x128xf32>,
    %cst_45 = arith.constant 0.000000e+00 : f32
    %55 = vector.broadcast %cst_45 : f32 to vector<13x13x128xf32>
    %56 = arith.maximumf %33, %55 : vector<13x13x128xf32>
    %c2_46 = arith.constant 2 : index
    %c0_47 = arith.constant 0 : index
    %c0_48 = arith.constant 0 : index
    %c0_49 = arith.constant 0 : index
    %57 = vector.load %arg3[%c2_46, %c0_47, %c0_48, %c0_49] : memref<4x13x13x128xf32, #tpu.memory_space<vmem>>, vector<1x13x13x128xf32>
    %58 = vector.shape_cast %57 : vector<1x13x13x128xf32> to vector<13x13x128xf32>
    %59 = vector.shape_cast %56 : vector<13x13x128xf32> to vector<1x13x13x128xf32>
    tpu.vector_store %arg3[%c2_46, %c0_47, %c0_48, %c0_49], %59 {strides = array<i32>} : memref<4x13x13x128xf32, #tpu.memory_space<vmem>>, vector<1x13x13x128xf32>,
    %c3_50 = arith.constant 3 : index
    %c0_51 = arith.constant 0 : index
    %c0_52 = arith.constant 0 : index
    %c0_53 = arith.constant 0 : index
    %60 = vector.load %arg2[%c3_50, %c0_51, %c0_52, %c0_53] : memref<4x13x13x128xf32, #tpu.memory_space<vmem>>, vector<1x13x13x128xf32>
    %61 = vector.shape_cast %60 : vector<1x13x13x128xf32> to vector<13x13x128xf32>
    %62 = vector.shape_cast %35 : vector<13x13x128xf32> to vector<1x13x13x128xf32>
    tpu.vector_store %arg2[%c3_50, %c0_51, %c0_52, %c0_53], %62 {strides = array<i32>} : memref<4x13x13x128xf32, #tpu.memory_space<vmem>>, vector<1x13x13x128xf32>,
    %cst_54 = arith.constant 0.000000e+00 : f32
    %63 = vector.broadcast %cst_54 : f32 to vector<13x13x128xf32>
    %64 = arith.maximumf %35, %63 : vector<13x13x128xf32>
    %c3_55 = arith.constant 3 : index
    %c0_56 = arith.constant 0 : index
    %c0_57 = arith.constant 0 : index
    %c0_58 = arith.constant 0 : index
    %65 = vector.load %arg3[%c3_55, %c0_56, %c0_57, %c0_58] : memref<4x13x13x128xf32, #tpu.memory_space<vmem>>, vector<1x13x13x128xf32>
    %66 = vector.shape_cast %65 : vector<1x13x13x128xf32> to vector<13x13x128xf32>
    %67 = vector.shape_cast %64 : vector<13x13x128xf32> to vector<1x13x13x128xf32>
    tpu.vector_store %arg3[%c3_55, %c0_56, %c0_57, %c0_58], %67 {strides = array<i32>} : memref<4x13x13x128xf32, #tpu.memory_space<vmem>>, vector<1x13x13x128xf32>,
    return
  }
  func.func @transform_0(%arg0: i32) -> (i32, i32, i32) {
    %c0_i32 = arith.constant 0 : i32
    %c0_i32_0 = arith.constant 0 : i32
    %c0_i32_1 = arith.constant 0 : i32
    return %c0_i32, %c0_i32_0, %arg0 : i32, i32, i32
  }
  func.func @transform_1(%arg0: i32) -> (i32, i32, i32, i32) {
    %c0_i32 = arith.constant 0 : i32
    %c0_i32_0 = arith.constant 0 : i32
    %c0_i32_1 = arith.constant 0 : i32
    %c0_i32_2 = arith.constant 0 : i32
    return %c0_i32, %c0_i32_0, %c0_i32_1, %arg0 : i32, i32, i32, i32
  }
  func.func @transform_2(%arg0: i32) -> (i32, i32, i32, i32) {
    %c0_i32 = arith.constant 0 : i32
    %c0_i32_0 = arith.constant 0 : i32
    %c0_i32_1 = arith.constant 0 : i32
    %c0_i32_2 = arith.constant 0 : i32
    return %c0_i32, %c0_i32_0, %c0_i32_1, %arg0 : i32, i32, i32, i32
  }
}

</mosaic_0001>

<llo_original>
// kernel: tpu_custom_call.1
$region0: #{tpu_custom_call.1}
  #allocation0 [shape = 'u32[]', space=smem, size = 0x4, offset = 0x4, fixed_abs, tag = 'smem constant byte address 0x4 - core index']
  #allocation1 [shape = 'u32[144,128]{1,0:T(1,128)}', space=vmem, size = 0x12000, scoped, tag = 'internal scratch']
  %s0 = inlined_call_operand.hbm [shape: f32[16,16,128], index: 0, kind: input, shape index: {}]
  %s1 = inlined_call_operand.vmem [shape: f32[4,13,13,128], index: 1, kind: output, shape index: {0}]
  %s2 = inlined_call_operand.vmem [shape: f32[4,13,13,128], index: 2, kind: output, shape index: {1}]
  %3 = xla_tuple %s1, %s2
  %s4 = sld [smem:[#allocation0]]
  $region26: #{tpu_custom_call.1} parent=0
    _
  %s6 = ssub.s32 1, %s4
  %s7 = scalar_select 0, %s6, %s4
  $region1: #{tpu_custom_call.1} parent=0
    #allocation2 [shape = 'u8[131072]{0}', space=vmem, size = 0x20000, scoped, tag = 'input window, operand 0, single buffered']
    #allocation3 [shape = 's32[1]{0}', space=sflag, size = 0x4, scoped, tag = 'scoped memory for tpu_custom_call.1']
    %8 = vsyncpa [#allocation3], 0
    // Predicated region
    $region2: #{tpu_custom_call.1} parent=1 // pred_check
      _
    $region3: #{tpu_custom_call.1} parent=1 // pred_check_branch
      %10 = sbr.rel (0) target = $region5
    $region4: #{tpu_custom_call.1} parent=1 // pred_region
      %s12 = ssub.s32 4096, 4096
      %13 = vsyncadd [#allocation3], %s12
      %s14 = sshll.u32 [#allocation2], 4
      %s15 = int_to_ptr.vmem [resolvable:$true] %s14
      %20 = dma.hbm_to_vmem [thread:$0]  %s0, 4096, %s15, [#allocation3], 128, 128, 8
    $region5: #{tpu_custom_call.1} parent=1 // pred_fallthru
      _
    // Predicated region
    $region6: #{tpu_custom_call.1} parent=1 // pred_check
      _
    $region7: #{tpu_custom_call.1} parent=1 // pred_check_branch
      %22 = sbr.rel (0) target = $region9
    $region8: #{tpu_custom_call.1} parent=1 // pred_region
      %23 = dma.done [#allocation3], 4096
    $region9: #{tpu_custom_call.1} parent=1 // pred_fallthru
      _
    %v24 = vld [vmem:[#allocation2] sm:$0xff]
    %v25 = vld [vmem:[#allocation2 + $0x8] sm:$0xff]
    %v26 = vld [vmem:[#allocation2 + $0x10] sm:$0xff]
    %v27 = vld [vmem:[#allocation2 + $0x18] sm:$0xff]
    %v28 = vld [vmem:[#allocation2 + $0x20] sm:$0xff]
    %v29 = vld [vmem:[#allocation2 + $0x28] sm:$0xff]
    %v30 = vld [vmem:[#allocation2 + $0x30] sm:$0xff]
    %v31 = vld [vmem:[#allocation2 + $0x38] sm:$0xff]
    %v32 = vld [vmem:[#allocation2 + $0x40] sm:$0xff]
    %v33 = vld [vmem:[#allocation2 + $0x48] sm:$0xff]
    %v34 = vld [vmem:[#allocation2 + $0x50] sm:$0xff]
    %v35 = vld [vmem:[#allocation2 + $0x58] sm:$0xff]
    %v36 = vld [vmem:[#allocation2 + $0x60] sm:$0xff]
    %v37 = vld [vmem:[#allocation2 + $0x68] sm:$0xff]
    %v38 = vld [vmem:[#allocation2 + $0x70] sm:$0xff]
    %v39 = vld [vmem:[#allocation2 + $0x78] sm:$0xff]
    %v40 = vld [vmem:[#allocation2 + $0x80] sm:$0xff]
    %v41 = vld [vmem:[#allocation2 + $0x88] sm:$0xff]
    %v42 = vld [vmem:[#allocation2 + $0x90] sm:$0xff]
    %v43 = vld [vmem:[#allocation2 + $0x98] sm:$0xff]
    %v44 = vld [vmem:[#allocation2 + $0xa0] sm:$0xff]
    %v45 = vld [vmem:[#allocation2 + $0xa8] sm:$0xff]
    %v46 = vld [vmem:[#allocation2 + $0xb0] sm:$0xff]
    %v47 = vld [vmem:[#allocation2 + $0xb8] sm:$0xff]
    %v48 = vld [vmem:[#allocation2 + $0xc0] sm:$0xff]
    %v49 = vld [vmem:[#allocation2 + $0xc8] sm:$0xff]
    %s50 = scalar_lea.vmem [#allocation2], 16
    %v51 = vld [vmem:[%s50] sm:$0xff]
    %v52 = vld [vmem:[%s50 + $0x8] sm:$0xff]
    %v53 = vld [vmem:[%s50 + $0x10] sm:$0xff]
    %v54 = vld [vmem:[%s50 + $0x18] sm:$0xff]
    %v55 = vld [vmem:[%s50 + $0x20] sm:$0xff]
    %v56 = vld [vmem:[%s50 + $0x28] sm:$0xff]
    %v57 = vld [vmem:[%s50 + $0x30] sm:$0xff]
    %v58 = vld [vmem:[%s50 + $0x38] sm:$0xff]
    %v59 = vld [vmem:[%s50 + $0x40] sm:$0xff]
    %v60 = vld [vmem:[%s50 + $0x48] sm:$0xff]
    %v61 = vld [vmem:[%s50 + $0x50] sm:$0xff]
    %v62 = vld [vmem:[%s50 + $0x58] sm:$0xff]
    %v63 = vld [vmem:[%s50 + $0x60] sm:$0xff]
    %v64 = vld [vmem:[%s50 + $0x68] sm:$0xff]
    %v65 = vld [vmem:[%s50 + $0x70] sm:$0xff]
    %v66 = vld [vmem:[%s50 + $0x78] sm:$0xff]
    %v67 = vld [vmem:[%s50 + $0x80] sm:$0xff]
    %v68 = vld [vmem:[%s50 + $0x88] sm:$0xff]
    %v69 = vld [vmem:[%s50 + $0x90] sm:$0xff]
    %v70 = vld [vmem:[%s50 + $0x98] sm:$0xff]
    %v71 = vld [vmem:[%s50 + $0xa0] sm:$0xff]
    %v72 = vld [vmem:[%s50 + $0xa8] sm:$0xff]
    %v73 = vld [vmem:[%s50 + $0xb0] sm:$0xff]
    %v74 = vld [vmem:[%s50 + $0xb8] sm:$0xff]
    %v75 = vld [vmem:[%s50 + $0xc0] sm:$0xff]
    %v76 = vld [vmem:[%s50 + $0xc8] sm:$0xff]
    %v77 = vadd.f32 %v24, %v51
    %v78 = vadd.f32 %v25, %v52
    %v79 = vadd.f32 %v26, %v53
    %v80 = vadd.f32 %v27, %v54
    %v81 = vadd.f32 %v28, %v55
    %v82 = vadd.f32 %v29, %v56
    %v83 = vadd.f32 %v30, %v57
    %v84 = vadd.f32 %v31, %v58
    %v85 = vadd.f32 %v32, %v59
    %v86 = vadd.f32 %v33, %v60
    %v87 = vadd.f32 %v34, %v61
    %v88 = vadd.f32 %v35, %v62
    %v89 = vadd.f32 %v36, %v63
    %v90 = vadd.f32 %v37, %v64
    %v91 = vadd.f32 %v38, %v65
    %v92 = vadd.f32 %v39, %v66
    %v93 = vadd.f32 %v40, %v67
    %v94 = vadd.f32 %v41, %v68
    %v95 = vadd.f32 %v42, %v69
    %v96 = vadd.f32 %v43, %v70
    %v97 = vadd.f32 %v44, %v71
    %v98 = vadd.f32 %v45, %v72
    %v99 = vadd.f32 %v46, %v73
    %v100 = vadd.f32 %v47, %v74
    %v101 = vadd.f32 %v48, %v75
    %v102 = vadd.f32 %v49, %v76
    %s103 = scalar_lea.vmem [#allocation2], 32
    %v104 = vld [vmem:[%s103] sm:$0xff]
    %v105 = vld [vmem:[%s103 + $0x8] sm:$0xff]
    %v106 = vld [vmem:[%s103 + $0x10] sm:$0xff]
    %v107 = vld [vmem:[%s103 + $0x18] sm:$0xff]
    %v108 = vld [vmem:[%s103 + $0x20] sm:$0xff]
    %v109 = vld [vmem:[%s103 + $0x28] sm:$0xff]
    %v110 = vld [vmem:[%s103 + $0x30] sm:$0xff]
    %v111 = vld [vmem:[%s103 + $0x38] sm:$0xff]
    %v112 = vld [vmem:[%s103 + $0x40] sm:$0xff]
    %v113 = vld [vmem:[%s103 + $0x48] sm:$0xff]
    %v114 = vld [vmem:[%s103 + $0x50] sm:$0xff]
    %v115 = vld [vmem:[%s103 + $0x58] sm:$0xff]
    %v116 = vld [vmem:[%s103 + $0x60] sm:$0xff]
    %v117 = vld [vmem:[%s103 + $0x68] sm:$0xff]
    %v118 = vld [vmem:[%s103 + $0x70] sm:$0xff]
    %v119 = vld [vmem:[%s103 + $0x78] sm:$0xff]
    %v120 = vld [vmem:[%s103 + $0x80] sm:$0xff]
    %v121 = vld [vmem:[%s103 + $0x88] sm:$0xff]
    %v122 = vld [vmem:[%s103 + $0x90] sm:$0xff]
    %v123 = vld [vmem:[%s103 + $0x98] sm:$0xff]
    %v124 = vld [vmem:[%s103 + $0xa0] sm:$0xff]
    %v125 = vld [vmem:[%s103 + $0xa8] sm:$0xff]
    %v126 = vld [vmem:[%s103 + $0xb0] sm:$0xff]
    %v127 = vld [vmem:[%s103 + $0xb8] sm:$0xff]
    %v128 = vld [vmem:[%s103 + $0xc0] sm:$0xff]
    %v129 = vld [vmem:[%s103 + $0xc8] sm:$0xff]
    %v130 = vadd.f32 %v77, %v104
    %v131 = vadd.f32 %v78, %v105
    %v132 = vadd.f32 %v79, %v106
    %v133 = vadd.f32 %v80, %v107
    %v134 = vadd.f32 %v81, %v108
    %v135 = vadd.f32 %v82, %v109
    %v136 = vadd.f32 %v83, %v110
    %v137 = vadd.f32 %v84, %v111
    %v138 = vadd.f32 %v85, %v112
    %v139 = vadd.f32 %v86, %v113
    %v140 = vadd.f32 %v87, %v114
    %v141 = vadd.f32 %v88, %v115
    %v142 = vadd.f32 %v89, %v116
    %v143 = vadd.f32 %v90, %v117
    %v144 = vadd.f32 %v91, %v118
    %v145 = vadd.f32 %v92, %v119
    %v146 = vadd.f32 %v93, %v120
    %v147 = vadd.f32 %v94, %v121
    %v148 = vadd.f32 %v95, %v122
    %v149 = vadd.f32 %v96, %v123
    %v150 = vadd.f32 %v97, %v124
    %v151 = vadd.f32 %v98, %v125
    %v152 = vadd.f32 %v99, %v126
    %v153 = vadd.f32 %v100, %v127
    %v154 = vadd.f32 %v101, %v128
    %v155 = vadd.f32 %v102, %v129
    %s156 = scalar_lea.vmem [#allocation2], 48
    %v157 = vld [vmem:[%s156] sm:$0xff]
    %v158 = vld [vmem:[%s156 + $0x8] sm:$0xff]
    %v159 = vld [vmem:[%s156 + $0x10] sm:$0xff]
    %v160 = vld [vmem:[%s156 + $0x18] sm:$0xff]
    %v161 = vld [vmem:[%s156 + $0x20] sm:$0xff]
    %v162 = vld [vmem:[%s156 + $0x28] sm:$0xff]
    %v163 = vld [vmem:[%s156 + $0x30] sm:$0xff]
    %v164 = vld [vmem:[%s156 + $0x38] sm:$0xff]
    %v165 = vld [vmem:[%s156 + $0x40] sm:$0xff]
    %v166 = vld [vmem:[%s156 + $0x48] sm:$0xff]
    %v167 = vld [vmem:[%s156 + $0x50] sm:$0xff]
    %v168 = vld [vmem:[%s156 + $0x58] sm:$0xff]
    %v169 = vld [vmem:[%s156 + $0x60] sm:$0xff]
    %v170 = vld [vmem:[%s156 + $0x68] sm:$0xff]
    %v171 = vld [vmem:[%s156 + $0x70] sm:$0xff]
    %v172 = vld [vmem:[%s156 + $0x78] sm:$0xff]
    %v173 = vld [vmem:[%s156 + $0x80] sm:$0xff]
    %v174 = vld [vmem:[%s156 + $0x88] sm:$0xff]
    %v175 = vld [vmem:[%s156 + $0x90] sm:$0xff]
    %v176 = vld [vmem:[%s156 + $0x98] sm:$0xff]
    %v177 = vld [vmem:[%s156 + $0xa0] sm:$0xff]
    %v178 = vld [vmem:[%s156 + $0xa8] sm:$0xff]
    %v179 = vld [vmem:[%s156 + $0xb0] sm:$0xff]
    %v180 = vld [vmem:[%s156 + $0xb8] sm:$0xff]
    %v181 = vld [vmem:[%s156 + $0xc0] sm:$0xff]
    %v182 = vld [vmem:[%s156 + $0xc8] sm:$0xff]
    %v183 = vadd.f32 %v130, %v157
    %v184 = vadd.f32 %v131, %v158
    %v185 = vadd.f32 %v132, %v159
    %v186 = vadd.f32 %v133, %v160
    %v187 = vadd.f32 %v134, %v161
    %v188 = vadd.f32 %v135, %v162
    %v189 = vadd.f32 %v136, %v163
    %v190 = vadd.f32 %v137, %v164
    %v191 = vadd.f32 %v138, %v165
    %v192 = vadd.f32 %v139, %v166
    %v193 = vadd.f32 %v140, %v167
    %v194 = vadd.f32 %v141, %v168
    %v195 = vadd.f32 %v142, %v169
    %v196 = vadd.f32 %v143, %v170
    %v197 = vadd.f32 %v144, %v171
    %v198 = vadd.f32 %v145, %v172
    %v199 = vadd.f32 %v146, %v173
    %v200 = vadd.f32 %v147, %v174
    %v201 = vadd.f32 %v148, %v175
    %v202 = vadd.f32 %v149, %v176
    %v203 = vadd.f32 %v150, %v177
    %v204 = vadd.f32 %v151, %v178
    %v205 = vadd.f32 %v152, %v179
    %v206 = vadd.f32 %v153, %v180
    %v207 = vadd.f32 %v154, %v181
    %v208 = vadd.f32 %v155, %v182
    %v209 = vsub.f32 0.0, %v183
    %v210 = vsub.f32 0.0, %v184
    %v211 = vsub.f32 0.0, %v185
    %v212 = vsub.f32 0.0, %v186
    %v213 = vsub.f32 0.0, %v187
    %v214 = vsub.f32 0.0, %v188
    %v215 = vsub.f32 0.0, %v189
    %v216 = vsub.f32 0.0, %v190
    %v217 = vsub.f32 0.0, %v191
    %v218 = vsub.f32 0.0, %v192
    %v219 = vsub.f32 0.0, %v193
    %v220 = vsub.f32 0.0, %v194
    %v221 = vsub.f32 0.0, %v195
    %v222 = vsub.f32 0.0, %v196
    %v223 = vsub.f32 0.0, %v197
    %v224 = vsub.f32 0.0, %v198
    %v225 = vsub.f32 0.0, %v199
    %v226 = vsub.f32 0.0, %v200
    %v227 = vsub.f32 0.0, %v201
    %v228 = vsub.f32 0.0, %v202
    %v229 = vsub.f32 0.0, %v203
    %v230 = vsub.f32 0.0, %v204
    %v231 = vsub.f32 0.0, %v205
    %v232 = vsub.f32 0.0, %v206
    %v233 = vsub.f32 0.0, %v207
    %v234 = vsub.f32 0.0, %v208
    %vm261 = vcmask 1046528
    %v262 = vrot.slane %v183, 1
    %v263 = vrot.slane %v184, 1
    %v264 = vsel %vm261, %v262, %v263
    %v265 = vrot.slane %v185, 1
    %v266 = vrot.slane %v186, 1
    %v267 = vsel %vm261, %v265, %v266
    %v268 = vrot.slane %v187, 1
    %v269 = vrot.slane %v188, 1
    %v270 = vsel %vm261, %v268, %v269
    %v271 = vrot.slane %v189, 1
    %v272 = vrot.slane %v190, 1
    %v273 = vsel %vm261, %v271, %v272
    %v274 = vrot.slane %v191, 1
    %v275 = vrot.slane %v192, 1
    %v276 = vsel %vm261, %v274, %v275
    %v277 = vrot.slane %v193, 1
    %v278 = vrot.slane %v194, 1
    %v279 = vsel %vm261, %v277, %v278
    %v280 = vrot.slane %v195, 1
    %v281 = vrot.slane %v196, 1
    %v282 = vsel %vm261, %v280, %v281
    %v283 = vrot.slane %v197, 1
    %v284 = vrot.slane %v198, 1
    %v285 = vsel %vm261, %v283, %v284
    %v286 = vrot.slane %v199, 1
    %v287 = vrot.slane %v200, 1
    %v288 = vsel %vm261, %v286, %v287
    %v289 = vrot.slane %v201, 1
    %v290 = vrot.slane %v202, 1
    %v291 = vsel %vm261, %v289, %v290
    %v292 = vrot.slane %v203, 1
    %v293 = vrot.slane %v204, 1
    %v294 = vsel %vm261, %v292, %v293
    %v295 = vrot.slane %v205, 1
    %v296 = vrot.slane %v206, 1
    %v297 = vsel %vm261, %v295, %v296
    %v298 = vrot.slane %v207, 1
    %v299 = vrot.slane %v208, 1
    %v300 = vsel %vm261, %v298, %v299
    %v327 = vsub.f32 %v209, %v264
    %v328 = vsub.f32 %v210, %v263
    %v329 = vsub.f32 %v211, %v267
    %v330 = vsub.f32 %v212, %v266
    %v331 = vsub.f32 %v213, %v270
    %v332 = vsub.f32 %v214, %v269
    %v333 = vsub.f32 %v215, %v273
    %v334 = vsub.f32 %v216, %v272
    %v335 = vsub.f32 %v217, %v276
    %v336 = vsub.f32 %v218, %v275
    %v337 = vsub.f32 %v219, %v279
    %v338 = vsub.f32 %v220, %v278
    %v339 = vsub.f32 %v221, %v282
    %v340 = vsub.f32 %v222, %v281
    %v341 = vsub.f32 %v223, %v285
    %v342 = vsub.f32 %v224, %v284
    %v343 = vsub.f32 %v225, %v288
    %v344 = vsub.f32 %v226, %v287
    %v345 = vsub.f32 %v227, %v291
    %v346 = vsub.f32 %v228, %v290
    %v347 = vsub.f32 %v229, %v294
    %v348 = vsub.f32 %v230, %v293
    %v349 = vsub.f32 %v231, %v297
    %v350 = vsub.f32 %v232, %v296
    %v351 = vsub.f32 %v233, %v300
    %v352 = vsub.f32 %v234, %v299
    %vm353 = vcmask 1045504
    %v354 = vrot.slane %v183, 2
    %v355 = vrot.slane %v184, 2
    %v356 = vsel %vm353, %v354, %v355
    %v357 = vrot.slane %v185, 2
    %v358 = vrot.slane %v186, 2
    %v359 = vsel %vm353, %v357, %v358
    %v360 = vrot.slane %v187, 2
    %v361 = vrot.slane %v188, 2
    %v362 = vsel %vm353, %v360, %v361
    %v363 = vrot.slane %v189, 2
    %v364 = vrot.slane %v190, 2
    %v365 = vsel %vm353, %v363, %v364
    %v366 = vrot.slane %v191, 2
    %v367 = vrot.slane %v192, 2
    %v368 = vsel %vm353, %v366, %v367
    %v369 = vrot.slane %v193, 2
    %v370 = vrot.slane %v194, 2
    %v371 = vsel %vm353, %v369, %v370
    %v372 = vrot.slane %v195, 2
    %v373 = vrot.slane %v196, 2
    %v374 = vsel %vm353, %v372, %v373
    %v375 = vrot.slane %v197, 2
    %v376 = vrot.slane %v198, 2
    %v377 = vsel %vm353, %v375, %v376
    %v378 = vrot.slane %v199, 2
    %v379 = vrot.slane %v200, 2
    %v380 = vsel %vm353, %v378, %v379
    %v381 = vrot.slane %v201, 2
    %v382 = vrot.slane %v202, 2
    %v383 = vsel %vm353, %v381, %v382
    %v384 = vrot.slane %v203, 2
    %v385 = vrot.slane %v204, 2
    %v386 = vsel %vm353, %v384, %v385
    %v387 = vrot.slane %v205, 2
    %v388 = vrot.slane %v206, 2
    %v389 = vsel %vm353, %v387, %v388
    %v390 = vrot.slane %v207, 2
    %v391 = vrot.slane %v208, 2
    %v392 = vsel %vm353, %v390, %v391
    %v419 = vadd.f32 %v327, %v356
    %v420 = vadd.f32 %v328, %v355
    %v421 = vadd.f32 %v329, %v359
    %v422 = vadd.f32 %v330, %v358
    %v423 = vadd.f32 %v331, %v362
    %v424 = vadd.f32 %v332, %v361
    %v425 = vadd.f32 %v333, %v365
    %v426 = vadd.f32 %v334, %v364
    %v427 = vadd.f32 %v335, %v368
    %v428 = vadd.f32 %v336, %v367
    %v429 = vadd.f32 %v337, %v371
    %v430 = vadd.f32 %v338, %v370
    %v431 = vadd.f32 %v339, %v374
    %v432 = vadd.f32 %v340, %v373
    %v433 = vadd.f32 %v341, %v377
    %v434 = vadd.f32 %v342, %v376
    %v435 = vadd.f32 %v343, %v380
    %v436 = vadd.f32 %v344, %v379
    %v437 = vadd.f32 %v345, %v383
    %v438 = vadd.f32 %v346, %v382
    %v439 = vadd.f32 %v347, %v386
    %v440 = vadd.f32 %v348, %v385
    %v441 = vadd.f32 %v349, %v389
    %v442 = vadd.f32 %v350, %v388
    %v443 = vadd.f32 %v351, %v392
    %v444 = vadd.f32 %v352, %v391
    %vm445 = vcmask 1044480
    %v446 = vrot.slane %v183, 3
    %v447 = vrot.slane %v184, 3
    %v448 = vsel %vm445, %v446, %v447
    %v449 = vrot.slane %v185, 3
    %v450 = vrot.slane %v186, 3
    %v451 = vsel %vm445, %v449, %v450
    %v452 = vrot.slane %v187, 3
    %v453 = vrot.slane %v188, 3
    %v454 = vsel %vm445, %v452, %v453
    %v455 = vrot.slane %v189, 3
    %v456 = vrot.slane %v190, 3
    %v457 = vsel %vm445, %v455, %v456
    %v458 = vrot.slane %v191, 3
    %v459 = vrot.slane %v192, 3
    %v460 = vsel %vm445, %v458, %v459
    %v461 = vrot.slane %v193, 3
    %v462 = vrot.slane %v194, 3
    %v463 = vsel %vm445, %v461, %v462
    %v464 = vrot.slane %v195, 3
    %v465 = vrot.slane %v196, 3
    %v466 = vsel %vm445, %v464, %v465
    %v467 = vrot.slane %v197, 3
    %v468 = vrot.slane %v198, 3
    %v469 = vsel %vm445, %v467, %v468
    %v470 = vrot.slane %v199, 3
    %v471 = vrot.slane %v200, 3
    %v472 = vsel %vm445, %v470, %v471
    %v473 = vrot.slane %v201, 3
    %v474 = vrot.slane %v202, 3
    %v475 = vsel %vm445, %v473, %v474
    %v476 = vrot.slane %v203, 3
    %v477 = vrot.slane %v204, 3
    %v478 = vsel %vm445, %v476, %v477
    %v479 = vrot.slane %v205, 3
    %v480 = vrot.slane %v206, 3
    %v481 = vsel %vm445, %v479, %v480
    %v482 = vrot.slane %v207, 3
    %v483 = vrot.slane %v208, 3
    %v484 = vsel %vm445, %v482, %v483
    %v511 = vadd.f32 %v419, %v448
    %v512 = vadd.f32 %v420, %v447
    %v513 = vadd.f32 %v421, %v451
    %v514 = vadd.f32 %v422, %v450
    %v515 = vadd.f32 %v423, %v454
    %v516 = vadd.f32 %v424, %v453
    %v517 = vadd.f32 %v425, %v457
    %v518 = vadd.f32 %v426, %v456
    %v519 = vadd.f32 %v427, %v460
    %v520 = vadd.f32 %v428, %v459
    %v521 = vadd.f32 %v429, %v463
    %v522 = vadd.f32 %v430, %v462
    %v523 = vadd.f32 %v431, %v466
    %v524 = vadd.f32 %v432, %v465
    %v525 = vadd.f32 %v433, %v469
    %v526 = vadd.f32 %v434, %v468
    %v527 = vadd.f32 %v435, %v472
    %v528 = vadd.f32 %v436, %v471
    %v529 = vadd.f32 %v437, %v475
    %v530 = vadd.f32 %v438, %v474
    %v531 = vadd.f32 %v439, %v478
    %v532 = vadd.f32 %v440, %v477
    %v533 = vadd.f32 %v441, %v481
    %v534 = vadd.f32 %v442, %v480
    %v535 = vadd.f32 %v443, %v484
    %v536 = vadd.f32 %v444, %v483
    %v537 = vsub.f32 0.0, %v511
    %v538 = vsub.f32 0.0, %v512
    %v539 = vsub.f32 0.0, %v513
    %v540 = vsub.f32 0.0, %v514
    %v541 = vsub.f32 0.0, %v515
    %v542 = vsub.f32 0.0, %v516
    %v543 = vsub.f32 0.0, %v517
    %v544 = vsub.f32 0.0, %v518
    %v545 = vsub.f32 0.0, %v519
    %v546 = vsub.f32 0.0, %v520
    %v547 = vsub.f32 0.0, %v521
    %v548 = vsub.f32 0.0, %v522
    %v549 = vsub.f32 0.0, %v523
    %v550 = vsub.f32 0.0, %v524
    %v551 = vsub.f32 0.0, %v525
    %v552 = vsub.f32 0.0, %v526
    %v553 = vsub.f32 0.0, %v527
    %v554 = vsub.f32 0.0, %v528
    %v555 = vsub.f32 0.0, %v529
    %v556 = vsub.f32 0.0, %v530
    %v557 = vsub.f32 0.0, %v531
    %v558 = vsub.f32 0.0, %v532
    %v559 = vsub.f32 0.0, %v533
    %v560 = vsub.f32 0.0, %v534
    %v561 = vsub.f32 0.0, %v535
    %v562 = vsub.f32 0.0, %v536
    %v563 = vsub.f32 %v77, %v104
    %v564 = vsub.f32 %v78, %v105
    %v565 = vsub.f32 %v79, %v106
    %v566 = vsub.f32 %v80, %v107
    %v567 = vsub.f32 %v81, %v108
    %v568 = vsub.f32 %v82, %v109
    %v569 = vsub.f32 %v83, %v110
    %v570 = vsub.f32 %v84, %v111
    %v571 = vsub.f32 %v85, %v112
    %v572 = vsub.f32 %v86, %v113
    %v573 = vsub.f32 %v87, %v114
    %v574 = vsub.f32 %v88, %v115
    %v575 = vsub.f32 %v89, %v116
    %v576 = vsub.f32 %v90, %v117
    %v577 = vsub.f32 %v91, %v118
    %v578 = vsub.f32 %v92, %v119
    %v579 = vsub.f32 %v93, %v120
    %v580 = vsub.f32 %v94, %v121
    %v581 = vsub.f32 %v95, %v122
    %v582 = vsub.f32 %v96, %v123
    %v583 = vsub.f32 %v97, %v124
    %v584 = vsub.f32 %v98, %v125
    %v585 = vsub.f32 %v99, %v126
    %v586 = vsub.f32 %v100, %v127
    %v587 = vsub.f32 %v101, %v128
    %v588 = vsub.f32 %v102, %v129
    %v589 = vsub.f32 %v563, %v157
    %v590 = vsub.f32 %v564, %v158
    %v591 = vsub.f32 %v565, %v159
    %v592 = vsub.f32 %v566, %v160
    %v593 = vsub.f32 %v567, %v161
    %v594 = vsub.f32 %v568, %v162
    %v595 = vsub.f32 %v569, %v163
    %v596 = vsub.f32 %v570, %v164
    %v597 = vsub.f32 %v571, %v165
    %v598 = vsub.f32 %v572, %v166
    %v599 = vsub.f32 %v573, %v167
    %v600 = vsub.f32 %v574, %v168
    %v601 = vsub.f32 %v575, %v169
    %v602 = vsub.f32 %v576, %v170
    %v603 = vsub.f32 %v577, %v171
    %v604 = vsub.f32 %v578, %v172
    %v605 = vsub.f32 %v579, %v173
    %v606 = vsub.f32 %v580, %v174
    %v607 = vsub.f32 %v581, %v175
    %v608 = vsub.f32 %v582, %v176
    %v609 = vsub.f32 %v583, %v177
    %v610 = vsub.f32 %v584, %v178
    %v611 = vsub.f32 %v585, %v179
    %v612 = vsub.f32 %v586, %v180
    %v613 = vsub.f32 %v587, %v181
    %v614 = vsub.f32 %v588, %v182
    %v615 = vsub.f32 0.0, %v589
    %v616 = vsub.f32 0.0, %v590
    %v617 = vsub.f32 0.0, %v591
    %v618 = vsub.f32 0.0, %v592
    %v619 = vsub.f32 0.0, %v593
    %v620 = vsub.f32 0.0, %v594
    %v621 = vsub.f32 0.0, %v595
    %v622 = vsub.f32 0.0, %v596
    %v623 = vsub.f32 0.0, %v597
    %v624 = vsub.f32 0.0, %v598
    %v625 = vsub.f32 0.0, %v599
    %v626 = vsub.f32 0.0, %v600
    %v627 = vsub.f32 0.0, %v601
    %v628 = vsub.f32 0.0, %v602
    %v629 = vsub.f32 0.0, %v603
    %v630 = vsub.f32 0.0, %v604
    %v631 = vsub.f32 0.0, %v605
    %v632 = vsub.f32 0.0, %v606
    %v633 = vsub.f32 0.0, %v607
    %v634 = vsub.f32 0.0, %v608
    %v635 = vsub.f32 0.0, %v609
    %v636 = vsub.f32 0.0, %v610
    %v637 = vsub.f32 0.0, %v611
    %v638 = vsub.f32 0.0, %v612
    %v639 = vsub.f32 0.0, %v613
    %v640 = vsub.f32 0.0, %v614
    %v667 = vrot.slane %v589, 1
    %v668 = vrot.slane %v590, 1
    %v669 = vsel %vm261, %v667, %v668
    %v670 = vrot.slane %v591, 1
    %v671 = vrot.slane %v592, 1
    %v672 = vsel %vm261, %v670, %v671
    %v673 = vrot.slane %v593, 1
    %v674 = vrot.slane %v594, 1
    %v675 = vsel %vm261, %v673, %v674
    %v676 = vrot.slane %v595, 1
    %v677 = vrot.slane %v596, 1
    %v678 = vsel %vm261, %v676, %v677
    %v679 = vrot.slane %v597, 1
    %v680 = vrot.slane %v598, 1
    %v681 = vsel %vm261, %v679, %v680
    %v682 = vrot.slane %v599, 1
    %v683 = vrot.slane %v600, 1
    %v684 = vsel %vm261, %v682, %v683
    %v685 = vrot.slane %v601, 1
    %v686 = vrot.slane %v602, 1
    %v687 = vsel %vm261, %v685, %v686
    %v688 = vrot.slane %v603, 1
    %v689 = vrot.slane %v604, 1
    %v690 = vsel %vm261, %v688, %v689
    %v691 = vrot.slane %v605, 1
    %v692 = vrot.slane %v606, 1
    %v693 = vsel %vm261, %v691, %v692
    %v694 = vrot.slane %v607, 1
    %v695 = vrot.slane %v608, 1
    %v696 = vsel %vm261, %v694, %v695
    %v697 = vrot.slane %v609, 1
    %v698 = vrot.slane %v610, 1
    %v699 = vsel %vm261, %v697, %v698
    %v700 = vrot.slane %v611, 1
    %v701 = vrot.slane %v612, 1
    %v702 = vsel %vm261, %v700, %v701
    %v703 = vrot.slane %v613, 1
    %v704 = vrot.slane %v614, 1
    %v705 = vsel %vm261, %v703, %v704
    %v732 = vsub.f32 %v615, %v669
    %v733 = vsub.f32 %v616, %v668
    %v734 = vsub.f32 %v617, %v672
    %v735 = vsub.f32 %v618, %v671
    %v736 = vsub.f32 %v619, %v675
    %v737 = vsub.f32 %v620, %v674
    %v738 = vsub.f32 %v621, %v678
    %v739 = vsub.f32 %v622, %v677
    %v740 = vsub.f32 %v623, %v681
    %v741 = vsub.f32 %v624, %v680
    %v742 = vsub.f32 %v625, %v684
    %v743 = vsub.f32 %v626, %v683
    %v744 = vsub.f32 %v627, %v687
    %v745 = vsub.f32 %v628, %v686
    %v746 = vsub.f32 %v629, %v690
    %v747 = vsub.f32 %v630, %v689
    %v748 = vsub.f32 %v631, %v693
    %v749 = vsub.f32 %v632, %v692
    %v750 = vsub.f32 %v633, %v696
    %v751 = vsub.f32 %v634, %v695
    %v752 = vsub.f32 %v635, %v699
    %v753 = vsub.f32 %v636, %v698
    %v754 = vsub.f32 %v637, %v702
    %v755 = vsub.f32 %v638, %v701
    %v756 = vsub.f32 %v639, %v705
    %v757 = vsub.f32 %v640, %v704
    %v758 = vrot.slane %v589, 2
    %v759 = vrot.slane %v590, 2
    %v760 = vsel %vm353, %v758, %v759
    %v761 = vrot.slane %v591, 2
    %v762 = vrot.slane %v592, 2
    %v763 = vsel %vm353, %v761, %v762
    %v764 = vrot.slane %v593, 2
    %v765 = vrot.slane %v594, 2
    %v766 = vsel %vm353, %v764, %v765
    %v767 = vrot.slane %v595, 2
    %v768 = vrot.slane %v596, 2
    %v769 = vsel %vm353, %v767, %v768
    %v770 = vrot.slane %v597, 2
    %v771 = vrot.slane %v598, 2
    %v772 = vsel %vm353, %v770, %v771
    %v773 = vrot.slane %v599, 2
    %v774 = vrot.slane %v600, 2
    %v775 = vsel %vm353, %v773, %v774
    %v776 = vrot.slane %v601, 2
    %v777 = vrot.slane %v602, 2
    %v778 = vsel %vm353, %v776, %v777
    %v779 = vrot.slane %v603, 2
    %v780 = vrot.slane %v604, 2
    %v781 = vsel %vm353, %v779, %v780
    %v782 = vrot.slane %v605, 2
    %v783 = vrot.slane %v606, 2
    %v784 = vsel %vm353, %v782, %v783
    %v785 = vrot.slane %v607, 2
    %v786 = vrot.slane %v608, 2
    %v787 = vsel %vm353, %v785, %v786
    %v788 = vrot.slane %v609, 2
    %v789 = vrot.slane %v610, 2
    %v790 = vsel %vm353, %v788, %v789
    %v791 = vrot.slane %v611, 2
    %v792 = vrot.slane %v612, 2
    %v793 = vsel %vm353, %v791, %v792
    %v794 = vrot.slane %v613, 2
    %v795 = vrot.slane %v614, 2
    %v796 = vsel %vm353, %v794, %v795
    %v823 = vsub.f32 %v732, %v760
    %v824 = vsub.f32 %v733, %v759
    %v825 = vsub.f32 %v734, %v763
    %v826 = vsub.f32 %v735, %v762
    %v827 = vsub.f32 %v736, %v766
    %v828 = vsub.f32 %v737, %v765
    %v829 = vsub.f32 %v738, %v769
    %v830 = vsub.f32 %v739, %v768
    %v831 = vsub.f32 %v740, %v772
    %v832 = vsub.f32 %v741, %v771
    %v833 = vsub.f32 %v742, %v775
    %v834 = vsub.f32 %v743, %v774
    %v835 = vsub.f32 %v744, %v778
    %v836 = vsub.f32 %v745, %v777
    %v837 = vsub.f32 %v746, %v781
    %v838 = vsub.f32 %v747, %v780
    %v839 = vsub.f32 %v748, %v784
    %v840 = vsub.f32 %v749, %v783
    %v841 = vsub.f32 %v750, %v787
    %v842 = vsub.f32 %v751, %v786
    %v843 = vsub.f32 %v752, %v790
    %v844 = vsub.f32 %v753, %v789
    %v845 = vsub.f32 %v754, %v793
    %v846 = vsub.f32 %v755, %v792
    %v847 = vsub.f32 %v756, %v796
    %v848 = vsub.f32 %v757, %v795
    %v849 = vrot.slane %v589, 3
    %v850 = vrot.slane %v590, 3
    %v851 = vsel %vm445, %v849, %v850
    %v852 = vrot.slane %v591, 3
    %v853 = vrot.slane %v592, 3
    %v854 = vsel %vm445, %v852, %v853
    %v855 = vrot.slane %v593, 3
    %v856 = vrot.slane %v594, 3
    %v857 = vsel %vm445, %v855, %v856
    %v858 = vrot.slane %v595, 3
    %v859 = vrot.slane %v596, 3
    %v860 = vsel %vm445, %v858, %v859
    %v861 = vrot.slane %v597, 3
    %v862 = vrot.slane %v598, 3
    %v863 = vsel %vm445, %v861, %v862
    %v864 = vrot.slane %v599, 3
    %v865 = vrot.slane %v600, 3
    %v866 = vsel %vm445, %v864, %v865
    %v867 = vrot.slane %v601, 3
    %v868 = vrot.slane %v602, 3
    %v869 = vsel %vm445, %v867, %v868
    %v870 = vrot.slane %v603, 3
    %v871 = vrot.slane %v604, 3
    %v872 = vsel %vm445, %v870, %v871
    %v873 = vrot.slane %v605, 3
    %v874 = vrot.slane %v606, 3
    %v875 = vsel %vm445, %v873, %v874
    %v876 = vrot.slane %v607, 3
    %v877 = vrot.slane %v608, 3
    %v878 = vsel %vm445, %v876, %v877
    %v879 = vrot.slane %v609, 3
    %v880 = vrot.slane %v610, 3
    %v881 = vsel %vm445, %v879, %v880
    %v882 = vrot.slane %v611, 3
    %v883 = vrot.slane %v612, 3
    %v884 = vsel %vm445, %v882, %v883
    %v885 = vrot.slane %v613, 3
    %v886 = vrot.slane %v614, 3
    %v887 = vsel %vm445, %v885, %v886
    %v914 = vsub.f32 %v823, %v851
    %v915 = vsub.f32 %v824, %v850
    %v916 = vsub.f32 %v825, %v854
    %v917 = vsub.f32 %v826, %v853
    %v918 = vsub.f32 %v827, %v857
    %v919 = vsub.f32 %v828, %v856
    %v920 = vsub.f32 %v829, %v860
    %v921 = vsub.f32 %v830, %v859
    %v922 = vsub.f32 %v831, %v863
    %v923 = vsub.f32 %v832, %v862
    %v924 = vsub.f32 %v833, %v866
    %v925 = vsub.f32 %v834, %v865
    %v926 = vsub.f32 %v835, %v869
    %v927 = vsub.f32 %v836, %v868
    %v928 = vsub.f32 %v837, %v872
    %v929 = vsub.f32 %v838, %v871
    %v930 = vsub.f32 %v839, %v875
    %v931 = vsub.f32 %v840, %v874
    %v932 = vsub.f32 %v841, %v878
    %v933 = vsub.f32 %v842, %v877
    %v934 = vsub.f32 %v843, %v881
    %v935 = vsub.f32 %v844, %v880
    %v936 = vsub.f32 %v845, %v884
    %v937 = vsub.f32 %v846, %v883
    %v938 = vsub.f32 %v847, %v887
    %v939 = vsub.f32 %v848, %v886
    %v940 = vsub.f32 0.0, %v914
    %v941 = vsub.f32 0.0, %v915
    %v942 = vsub.f32 0.0, %v916
    %v943 = vsub.f32 0.0, %v917
    %v944 = vsub.f32 0.0, %v918
    %v945 = vsub.f32 0.0, %v919
    %v946 = vsub.f32 0.0, %v920
    %v947 = vsub.f32 0.0, %v921
    %v948 = vsub.f32 0.0, %v922
    %v949 = vsub.f32 0.0, %v923
    %v950 = vsub.f32 0.0, %v924
    %v951 = vsub.f32 0.0, %v925
    %v952 = vsub.f32 0.0, %v926
    %v953 = vsub.f32 0.0, %v927
    %v954 = vsub.f32 0.0, %v928
    %v955 = vsub.f32 0.0, %v929
    %v956 = vsub.f32 0.0, %v930
    %v957 = vsub.f32 0.0, %v931
    %v958 = vsub.f32 0.0, %v932
    %v959 = vsub.f32 0.0, %v933
    %v960 = vsub.f32 0.0, %v934
    %v961 = vsub.f32 0.0, %v935
    %v962 = vsub.f32 0.0, %v936
    %v963 = vsub.f32 0.0, %v937
    %v964 = vsub.f32 0.0, %v938
    %v965 = vsub.f32 0.0, %v939
    %966 = vst [vmem:[%s1] sm:$0xff] %v511
    %967 = vst [vmem:[%s1 + $0x8] sm:$0x1f] %v512
    %968 = vst [vmem:[%s1 + $0x10] sm:$0xff] %v513
    %969 = vst [vmem:[%s1 + $0x18] sm:$0x1f] %v514
    %970 = vst [vmem:[%s1 + $0x20] sm:$0xff] %v515
    %971 = vst [vmem:[%s1 + $0x28] sm:$0x1f] %v516
    %972 = vst [vmem:[%s1 + $0x30] sm:$0xff] %v517
    %973 = vst [vmem:[%s1 + $0x38] sm:$0x1f] %v518
    %974 = vst [vmem:[%s1 + $0x40] sm:$0xff] %v519
    %975 = vst [vmem:[%s1 + $0x48] sm:$0x1f] %v520
    %976 = vst [vmem:[%s1 + $0x50] sm:$0xff] %v521
    %977 = vst [vmem:[%s1 + $0x58] sm:$0x1f] %v522
    %978 = vst [vmem:[%s1 + $0x60] sm:$0xff] %v523
    %979 = vst [vmem:[%s1 + $0x68] sm:$0x1f] %v524
    %980 = vst [vmem:[%s1 + $0x70] sm:$0xff] %v525
    %981 = vst [vmem:[%s1 + $0x78] sm:$0x1f] %v526
    %982 = vst [vmem:[%s1 + $0x80] sm:$0xff] %v527
    %983 = vst [vmem:[%s1 + $0x88] sm:$0x1f] %v528
    %984 = vst [vmem:[%s1 + $0x90] sm:$0xff] %v529
    %985 = vst [vmem:[%s1 + $0x98] sm:$0x1f] %v530
    %986 = vst [vmem:[%s1 + $0xa0] sm:$0xff] %v531
    %987 = vst [vmem:[%s1 + $0xa8] sm:$0x1f] %v532
    %988 = vst [vmem:[%s1 + $0xb0] sm:$0xff] %v533
    %989 = vst [vmem:[%s1 + $0xb8] sm:$0x1f] %v534
    %990 = vst [vmem:[%s1 + $0xc0] sm:$0xff] %v535
    %991 = vst [vmem:[%s1 + $0xc8] sm:$0x1f] %v536
    %v992 = vmax.f32 %v511, 0.0
    %v993 = vmax.f32 %v512, 0.0
    %v994 = vmax.f32 %v513, 0.0
    %v995 = vmax.f32 %v514, 0.0
    %v996 = vmax.f32 %v515, 0.0
    %v997 = vmax.f32 %v516, 0.0
    %v998 = vmax.f32 %v517, 0.0
    %v999 = vmax.f32 %v518, 0.0
    %v1000 = vmax.f32 %v519, 0.0
    %v1001 = vmax.f32 %v520, 0.0
    %v1002 = vmax.f32 %v521, 0.0
    %v1003 = vmax.f32 %v522, 0.0
    %v1004 = vmax.f32 %v523, 0.0
    %v1005 = vmax.f32 %v524, 0.0
    %v1006 = vmax.f32 %v525, 0.0
    %v1007 = vmax.f32 %v526, 0.0
    %v1008 = vmax.f32 %v527, 0.0
    %v1009 = vmax.f32 %v528, 0.0
    %v1010 = vmax.f32 %v529, 0.0
    %v1011 = vmax.f32 %v530, 0.0
    %v1012 = vmax.f32 %v531, 0.0
    %v1013 = vmax.f32 %v532, 0.0
    %v1014 = vmax.f32 %v533, 0.0
    %v1015 = vmax.f32 %v534, 0.0
    %v1016 = vmax.f32 %v535, 0.0
    %v1017 = vmax.f32 %v536, 0.0
    %1018 = vst [vmem:[%s2] sm:$0xff] %v992
    %1019 = vst [vmem:[%s2 + $0x8] sm:$0x1f] %v993
    %1020 = vst [vmem:[%s2 + $0x10] sm:$0xff] %v994
    %1021 = vst [vmem:[%s2 + $0x18] sm:$0x1f] %v995
    %1022 = vst [vmem:[%s2 + $0x20] sm:$0xff] %v996
    %1023 = vst [vmem:[%s2 + $0x28] sm:$0x1f] %v997
    %1024 = vst [vmem:[%s2 + $0x30] sm:$0xff] %v998
    %1025 = vst [vmem:[%s2 + $0x38] sm:$0x1f] %v999
    %1026 = vst [vmem:[%s2 + $0x40] sm:$0xff] %v1000
    %1027 = vst [vmem:[%s2 + $0x48] sm:$0x1f] %v1001
    %1028 = vst [vmem:[%s2 + $0x50] sm:$0xff] %v1002
    %1029 = vst [vmem:[%s2 + $0x58] sm:$0x1f] %v1003
    %1030 = vst [vmem:[%s2 + $0x60] sm:$0xff] %v1004
    %1031 = vst [vmem:[%s2 + $0x68] sm:$0x1f] %v1005
    %1032 = vst [vmem:[%s2 + $0x70] sm:$0xff] %v1006
    %1033 = vst [vmem:[%s2 + $0x78] sm:$0x1f] %v1007
    %1034 = vst [vmem:[%s2 + $0x80] sm:$0xff] %v1008
    %1035 = vst [vmem:[%s2 + $0x88] sm:$0x1f] %v1009
    %1036 = vst [vmem:[%s2 + $0x90] sm:$0xff] %v1010
    %1037 = vst [vmem:[%s2 + $0x98] sm:$0x1f] %v1011
    %1038 = vst [vmem:[%s2 + $0xa0] sm:$0xff] %v1012
    %1039 = vst [vmem:[%s2 + $0xa8] sm:$0x1f] %v1013
    %1040 = vst [vmem:[%s2 + $0xb0] sm:$0xff] %v1014
    %1041 = vst [vmem:[%s2 + $0xb8] sm:$0x1f] %v1015
    %1042 = vst [vmem:[%s2 + $0xc0] sm:$0xff] %v1016
    %1043 = vst [vmem:[%s2 + $0xc8] sm:$0x1f] %v1017
    %s1044 = scalar_lea.vmem %s1, 208
    %1045 = vst [vmem:[%s1044] sm:$0xff] %v537
    %1046 = vst [vmem:[%s1044 + $0x8] sm:$0x1f] %v538
    %1047 = vst [vmem:[%s1044 + $0x10] sm:$0xff] %v539
    %1048 = vst [vmem:[%s1044 + $0x18] sm:$0x1f] %v540
    %1049 = vst [vmem:[%s1044 + $0x20] sm:$0xff] %v541
    %1050 = vst [vmem:[%s1044 + $0x28] sm:$0x1f] %v542
    %1051 = vst [vmem:[%s1044 + $0x30] sm:$0xff] %v543
    %1052 = vst [vmem:[%s1044 + $0x38] sm:$0x1f] %v544
    %1053 = vst [vmem:[%s1044 + $0x40] sm:$0xff] %v545
    %1054 = vst [vmem:[%s1044 + $0x48] sm:$0x1f] %v546
    %1055 = vst [vmem:[%s1044 + $0x50] sm:$0xff] %v547
    %1056 = vst [vmem:[%s1044 + $0x58] sm:$0x1f] %v548
    %1057 = vst [vmem:[%s1044 + $0x60] sm:$0xff] %v549
    %1058 = vst [vmem:[%s1044 + $0x68] sm:$0x1f] %v550
    %1059 = vst [vmem:[%s1044 + $0x70] sm:$0xff] %v551
    %1060 = vst [vmem:[%s1044 + $0x78] sm:$0x1f] %v552
    %1061 = vst [vmem:[%s1044 + $0x80] sm:$0xff] %v553
    %1062 = vst [vmem:[%s1044 + $0x88] sm:$0x1f] %v554
    %1063 = vst [vmem:[%s1044 + $0x90] sm:$0xff] %v555
    %1064 = vst [vmem:[%s1044 + $0x98] sm:$0x1f] %v556
    %1065 = vst [vmem:[%s1044 + $0xa0] sm:$0xff] %v557
    %1066 = vst [vmem:[%s1044 + $0xa8] sm:$0x1f] %v558
    %1067 = vst [vmem:[%s1044 + $0xb0] sm:$0xff] %v559
    %1068 = vst [vmem:[%s1044 + $0xb8] sm:$0x1f] %v560
    %1069 = vst [vmem:[%s1044 + $0xc0] sm:$0xff] %v561
    %1070 = vst [vmem:[%s1044 + $0xc8] sm:$0x1f] %v562
    %v1071 = vmax.f32 %v537, 0.0
    %v1072 = vmax.f32 %v538, 0.0
    %v1073 = vmax.f32 %v539, 0.0
    %v1074 = vmax.f32 %v540, 0.0
    %v1075 = vmax.f32 %v541, 0.0
    %v1076 = vmax.f32 %v542, 0.0
    %v1077 = vmax.f32 %v543, 0.0
    %v1078 = vmax.f32 %v544, 0.0
    %v1079 = vmax.f32 %v545, 0.0
    %v1080 = vmax.f32 %v546, 0.0
    %v1081 = vmax.f32 %v547, 0.0
    %v1082 = vmax.f32 %v548, 0.0
    %v1083 = vmax.f32 %v549, 0.0
    %v1084 = vmax.f32 %v550, 0.0
    %v1085 = vmax.f32 %v551, 0.0
    %v1086 = vmax.f32 %v552, 0.0
    %v1087 = vmax.f32 %v553, 0.0
    %v1088 = vmax.f32 %v554, 0.0
    %v1089 = vmax.f32 %v555, 0.0
    %v1090 = vmax.f32 %v556, 0.0
    %v1091 = vmax.f32 %v557, 0.0
    %v1092 = vmax.f32 %v558, 0.0
    %v1093 = vmax.f32 %v559, 0.0
    %v1094 = vmax.f32 %v560, 0.0
    %v1095 = vmax.f32 %v561, 0.0
    %v1096 = vmax.f32 %v562, 0.0
    %s1097 = scalar_lea.vmem %s2, 208
    %1098 = vst [vmem:[%s1097] sm:$0xff] %v1071
    %1099 = vst [vmem:[%s1097 + $0x8] sm:$0x1f] %v1072
    %1100 = vst [vmem:[%s1097 + $0x10] sm:$0xff] %v1073
    %1101 = vst [vmem:[%s1097 + $0x18] sm:$0x1f] %v1074
    %1102 = vst [vmem:[%s1097 + $0x20] sm:$0xff] %v1075
    %1103 = vst [vmem:[%s1097 + $0x28] sm:$0x1f] %v1076
    %1104 = vst [vmem:[%s1097 + $0x30] sm:$0xff] %v1077
    %1105 = vst [vmem:[%s1097 + $0x38] sm:$0x1f] %v1078
    %1106 = vst [vmem:[%s1097 + $0x40] sm:$0xff] %v1079
    %1107 = vst [vmem:[%s1097 + $0x48] sm:$0x1f] %v1080
    %1108 = vst [vmem:[%s1097 + $0x50] sm:$0xff] %v1081
    %1109 = vst [vmem:[%s1097 + $0x58] sm:$0x1f] %v1082
    %1110 = vst [vmem:[%s1097 + $0x60] sm:$0xff] %v1083
    %1111 = vst [vmem:[%s1097 + $0x68] sm:$0x1f] %v1084
    %1112 = vst [vmem:[%s1097 + $0x70] sm:$0xff] %v1085
    %1113 = vst [vmem:[%s1097 + $0x78] sm:$0x1f] %v1086
    %1114 = vst [vmem:[%s1097 + $0x80] sm:$0xff] %v1087
    %1115 = vst [vmem:[%s1097 + $0x88] sm:$0x1f] %v1088
    %1116 = vst [vmem:[%s1097 + $0x90] sm:$0xff] %v1089
    %1117 = vst [vmem:[%s1097 + $0x98] sm:$0x1f] %v1090
    %1118 = vst [vmem:[%s1097 + $0xa0] sm:$0xff] %v1091
    %1119 = vst [vmem:[%s1097 + $0xa8] sm:$0x1f] %v1092
    %1120 = vst [vmem:[%s1097 + $0xb0] sm:$0xff] %v1093
    %1121 = vst [vmem:[%s1097 + $0xb8] sm:$0x1f] %v1094
    %1122 = vst [vmem:[%s1097 + $0xc0] sm:$0xff] %v1095
    %1123 = vst [vmem:[%s1097 + $0xc8] sm:$0x1f] %v1096
    %s1124 = scalar_lea.vmem %s1, 416
    %1125 = vst [vmem:[%s1124] sm:$0xff] %v914
    %1126 = vst [vmem:[%s1124 + $0x8] sm:$0x1f] %v915
    %1127 = vst [vmem:[%s1124 + $0x10] sm:$0xff] %v916
    %1128 = vst [vmem:[%s1124 + $0x18] sm:$0x1f] %v917
    %1129 = vst [vmem:[%s1124 + $0x20] sm:$0xff] %v918
    %1130 = vst [vmem:[%s1124 + $0x28] sm:$0x1f] %v919
    %1131 = vst [vmem:[%s1124 + $0x30] sm:$0xff] %v920
    %1132 = vst [vmem:[%s1124 + $0x38] sm:$0x1f] %v921
    %1133 = vst [vmem:[%s1124 + $0x40] sm:$0xff] %v922
    %1134 = vst [vmem:[%s1124 + $0x48] sm:$0x1f] %v923
    %1135 = vst [vmem:[%s1124 + $0x50] sm:$0xff] %v924
    %1136 = vst [vmem:[%s1124 + $0x58] sm:$0x1f] %v925
    %1137 = vst [vmem:[%s1124 + $0x60] sm:$0xff] %v926
    %1138 = vst [vmem:[%s1124 + $0x68] sm:$0x1f] %v927
    %1139 = vst [vmem:[%s1124 + $0x70] sm:$0xff] %v928
    %1140 = vst [vmem:[%s1124 + $0x78] sm:$0x1f] %v929
    %1141 = vst [vmem:[%s1124 + $0x80] sm:$0xff] %v930
    %1142 = vst [vmem:[%s1124 + $0x88] sm:$0x1f] %v931
    %1143 = vst [vmem:[%s1124 + $0x90] sm:$0xff] %v932
    %1144 = vst [vmem:[%s1124 + $0x98] sm:$0x1f] %v933
    %1145 = vst [vmem:[%s1124 + $0xa0] sm:$0xff] %v934
    %1146 = vst [vmem:[%s1124 + $0xa8] sm:$0x1f] %v935
    %1147 = vst [vmem:[%s1124 + $0xb0] sm:$0xff] %v936
    %1148 = vst [vmem:[%s1124 + $0xb8] sm:$0x1f] %v937
    %1149 = vst [vmem:[%s1124 + $0xc0] sm:$0xff] %v938
    %1150 = vst [vmem:[%s1124 + $0xc8] sm:$0x1f] %v939
    %v1151 = vmax.f32 %v914, 0.0
    %v1152 = vmax.f32 %v915, 0.0
    %v1153 = vmax.f32 %v916, 0.0
    %v1154 = vmax.f32 %v917, 0.0
    %v1155 = vmax.f32 %v918, 0.0
    %v1156 = vmax.f32 %v919, 0.0
    %v1157 = vmax.f32 %v920, 0.0
    %v1158 = vmax.f32 %v921, 0.0
    %v1159 = vmax.f32 %v922, 0.0
    %v1160 = vmax.f32 %v923, 0.0
    %v1161 = vmax.f32 %v924, 0.0
    %v1162 = vmax.f32 %v925, 0.0
    %v1163 = vmax.f32 %v926, 0.0
    %v1164 = vmax.f32 %v927, 0.0
    %v1165 = vmax.f32 %v928, 0.0
    %v1166 = vmax.f32 %v929, 0.0
    %v1167 = vmax.f32 %v930, 0.0
    %v1168 = vmax.f32 %v931, 0.0
    %v1169 = vmax.f32 %v932, 0.0
    %v1170 = vmax.f32 %v933, 0.0
    %v1171 = vmax.f32 %v934, 0.0
    %v1172 = vmax.f32 %v935, 0.0
    %v1173 = vmax.f32 %v936, 0.0
    %v1174 = vmax.f32 %v937, 0.0
    %v1175 = vmax.f32 %v938, 0.0
    %v1176 = vmax.f32 %v939, 0.0
    %s1177 = scalar_lea.vmem %s2, 416
    %1178 = vst [vmem:[%s1177] sm:$0xff] %v1151
    %1179 = vst [vmem:[%s1177 + $0x8] sm:$0x1f] %v1152
    %1180 = vst [vmem:[%s1177 + $0x10] sm:$0xff] %v1153
    %1181 = vst [vmem:[%s1177 + $0x18] sm:$0x1f] %v1154
    %1182 = vst [vmem:[%s1177 + $0x20] sm:$0xff] %v1155
    %1183 = vst [vmem:[%s1177 + $0x28] sm:$0x1f] %v1156
    %1184 = vst [vmem:[%s1177 + $0x30] sm:$0xff] %v1157
    %1185 = vst [vmem:[%s1177 + $0x38] sm:$0x1f] %v1158
    %1186 = vst [vmem:[%s1177 + $0x40] sm:$0xff] %v1159
    %1187 = vst [vmem:[%s1177 + $0x48] sm:$0x1f] %v1160
    %1188 = vst [vmem:[%s1177 + $0x50] sm:$0xff] %v1161
    %1189 = vst [vmem:[%s1177 + $0x58] sm:$0x1f] %v1162
    %1190 = vst [vmem:[%s1177 + $0x60] sm:$0xff] %v1163
    %1191 = vst [vmem:[%s1177 + $0x68] sm:$0x1f] %v1164
    %1192 = vst [vmem:[%s1177 + $0x70] sm:$0xff] %v1165
    %1193 = vst [vmem:[%s1177 + $0x78] sm:$0x1f] %v1166
    %1194 = vst [vmem:[%s1177 + $0x80] sm:$0xff] %v1167
    %1195 = vst [vmem:[%s1177 + $0x88] sm:$0x1f] %v1168
    %1196 = vst [vmem:[%s1177 + $0x90] sm:$0xff] %v1169
    %1197 = vst [vmem:[%s1177 + $0x98] sm:$0x1f] %v1170
    %1198 = vst [vmem:[%s1177 + $0xa0] sm:$0xff] %v1171
    %1199 = vst [vmem:[%s1177 + $0xa8] sm:$0x1f] %v1172
    %1200 = vst [vmem:[%s1177 + $0xb0] sm:$0xff] %v1173
    %1201 = vst [vmem:[%s1177 + $0xb8] sm:$0x1f] %v1174
    %1202 = vst [vmem:[%s1177 + $0xc0] sm:$0xff] %v1175
    %1203 = vst [vmem:[%s1177 + $0xc8] sm:$0x1f] %v1176
    %s1204 = scalar_lea.vmem %s1, 624
    %1205 = vst [vmem:[%s1204] sm:$0xff] %v940
    %1206 = vst [vmem:[%s1204 + $0x8] sm:$0x1f] %v941
    %1207 = vst [vmem:[%s1204 + $0x10] sm:$0xff] %v942
    %1208 = vst [vmem:[%s1204 + $0x18] sm:$0x1f] %v943
    %1209 = vst [vmem:[%s1204 + $0x20] sm:$0xff] %v944
    %1210 = vst [vmem:[%s1204 + $0x28] sm:$0x1f] %v945
    %1211 = vst [vmem:[%s1204 + $0x30] sm:$0xff] %v946
    %1212 = vst [vmem:[%s1204 + $0x38] sm:$0x1f] %v947
    %1213 = vst [vmem:[%s1204 + $0x40] sm:$0xff] %v948
    %1214 = vst [vmem:[%s1204 + $0x48] sm:$0x1f] %v949
    %1215 = vst [vmem:[%s1204 + $0x50] sm:$0xff] %v950
    %1216 = vst [vmem:[%s1204 + $0x58] sm:$0x1f] %v951
    %1217 = vst [vmem:[%s1204 + $0x60] sm:$0xff] %v952
    %1218 = vst [vmem:[%s1204 + $0x68] sm:$0x1f] %v953
    %1219 = vst [vmem:[%s1204 + $0x70] sm:$0xff] %v954
    %1220 = vst [vmem:[%s1204 + $0x78] sm:$0x1f] %v955
    %1221 = vst [vmem:[%s1204 + $0x80] sm:$0xff] %v956
    %1222 = vst [vmem:[%s1204 + $0x88] sm:$0x1f] %v957
    %1223 = vst [vmem:[%s1204 + $0x90] sm:$0xff] %v958
    %1224 = vst [vmem:[%s1204 + $0x98] sm:$0x1f] %v959
    %1225 = vst [vmem:[%s1204 + $0xa0] sm:$0xff] %v960
    %1226 = vst [vmem:[%s1204 + $0xa8] sm:$0x1f] %v961
    %1227 = vst [vmem:[%s1204 + $0xb0] sm:$0xff] %v962
    %1228 = vst [vmem:[%s1204 + $0xb8] sm:$0x1f] %v963
    %1229 = vst [vmem:[%s1204 + $0xc0] sm:$0xff] %v964
    %1230 = vst [vmem:[%s1204 + $0xc8] sm:$0x1f] %v965
    %v1231 = vmax.f32 %v940, 0.0
    %v1232 = vmax.f32 %v941, 0.0
    %v1233 = vmax.f32 %v942, 0.0
    %v1234 = vmax.f32 %v943, 0.0
    %v1235 = vmax.f32 %v944, 0.0
    %v1236 = vmax.f32 %v945, 0.0
    %v1237 = vmax.f32 %v946, 0.0
    %v1238 = vmax.f32 %v947, 0.0
    %v1239 = vmax.f32 %v948, 0.0
    %v1240 = vmax.f32 %v949, 0.0
    %v1241 = vmax.f32 %v950, 0.0
    %v1242 = vmax.f32 %v951, 0.0
    %v1243 = vmax.f32 %v952, 0.0
    %v1244 = vmax.f32 %v953, 0.0
    %v1245 = vmax.f32 %v954, 0.0
    %v1246 = vmax.f32 %v955, 0.0
    %v1247 = vmax.f32 %v956, 0.0
    %v1248 = vmax.f32 %v957, 0.0
    %v1249 = vmax.f32 %v958, 0.0
    %v1250 = vmax.f32 %v959, 0.0
    %v1251 = vmax.f32 %v960, 0.0
    %v1252 = vmax.f32 %v961, 0.0
    %v1253 = vmax.f32 %v962, 0.0
    %v1254 = vmax.f32 %v963, 0.0
    %v1255 = vmax.f32 %v964, 0.0
    %v1256 = vmax.f32 %v965, 0.0
    %s1257 = scalar_lea.vmem %s2, 624
    %1258 = vst [vmem:[%s1257] sm:$0xff] %v1231
    %1259 = vst [vmem:[%s1257 + $0x8] sm:$0x1f] %v1232
    %1260 = vst [vmem:[%s1257 + $0x10] sm:$0xff] %v1233
    %1261 = vst [vmem:[%s1257 + $0x18] sm:$0x1f] %v1234
    %1262 = vst [vmem:[%s1257 + $0x20] sm:$0xff] %v1235
    %1263 = vst [vmem:[%s1257 + $0x28] sm:$0x1f] %v1236
    %1264 = vst [vmem:[%s1257 + $0x30] sm:$0xff] %v1237
    %1265 = vst [vmem:[%s1257 + $0x38] sm:$0x1f] %v1238
    %1266 = vst [vmem:[%s1257 + $0x40] sm:$0xff] %v1239
    %1267 = vst [vmem:[%s1257 + $0x48] sm:$0x1f] %v1240
    %1268 = vst [vmem:[%s1257 + $0x50] sm:$0xff] %v1241
    %1269 = vst [vmem:[%s1257 + $0x58] sm:$0x1f] %v1242
    %1270 = vst [vmem:[%s1257 + $0x60] sm:$0xff] %v1243
    %1271 = vst [vmem:[%s1257 + $0x68] sm:$0x1f] %v1244
    %1272 = vst [vmem:[%s1257 + $0x70] sm:$0xff] %v1245
    %1273 = vst [vmem:[%s1257 + $0x78] sm:$0x1f] %v1246
    %1274 = vst [vmem:[%s1257 + $0x80] sm:$0xff] %v1247
    %1275 = vst [vmem:[%s1257 + $0x88] sm:$0x1f] %v1248
    %1276 = vst [vmem:[%s1257 + $0x90] sm:$0xff] %v1249
    %1277 = vst [vmem:[%s1257 + $0x98] sm:$0x1f] %v1250
    %1278 = vst [vmem:[%s1257 + $0xa0] sm:$0xff] %v1251
    %1279 = vst [vmem:[%s1257 + $0xa8] sm:$0x1f] %v1252
    %1280 = vst [vmem:[%s1257 + $0xb0] sm:$0xff] %v1253
    %1281 = vst [vmem:[%s1257 + $0xb8] sm:$0x1f] %v1254
    %1282 = vst [vmem:[%s1257 + $0xc0] sm:$0xff] %v1255
    %1283 = vst [vmem:[%s1257 + $0xc8] sm:$0x1f] %v1256
    // Predicated region
    $region10: #{tpu_custom_call.1} parent=1 // pred_check
      _
    $region11: #{tpu_custom_call.1} parent=1 // pred_check_branch
      %1285 = sbr.rel (0) target = $region13
    $region12: #{tpu_custom_call.1} parent=1 // pred_region
      _
    $region13: #{tpu_custom_call.1} parent=1 // pred_fallthru
      _
    // Predicated region
    $region14: #{tpu_custom_call.1} parent=1 // pred_check
      _
    $region15: #{tpu_custom_call.1} parent=1 // pred_check_branch
      %1287 = sbr.rel (0) target = $region17
    $region16: #{tpu_custom_call.1} parent=1 // pred_region
      _
    $region17: #{tpu_custom_call.1} parent=1 // pred_fallthru
      _
    // Predicated region
    $region18: #{tpu_custom_call.1} parent=1 // pred_check
      _
    $region19: #{tpu_custom_call.1} parent=1 // pred_check_branch
      %1289 = sbr.rel (0) target = $region21
    $region20: #{tpu_custom_call.1} parent=1 // pred_region
      _
    $region21: #{tpu_custom_call.1} parent=1 // pred_fallthru
      _
    // Predicated region
    $region22: #{tpu_custom_call.1} parent=1 // pred_check
      _
    $region23: #{tpu_custom_call.1} parent=1 // pred_check_branch
      %1291 = sbr.rel (0) target = $region25
    $region24: #{tpu_custom_call.1} parent=1 // pred_region
      _
    $region25: #{tpu_custom_call.1} parent=1 // pred_fallthru
      _
    %1292 = vsyncpa [#allocation3], 1

</llo_original>
